<compile_context>
chip_gen: v6e
topology: v6e:2x2x1
jax: 0.10.0
libtpu: 0.0.40
codegen_flags: <defaults>
</compile_context>

<pallas_src>
import functools

import numpy as np
import jax
import jax.numpy as jnp
from jax.experimental import pallas as pl
from jax.experimental.pallas import tpu as pltpu


def _round_up(x, m):
    return (x + m - 1) // m * m


def _choose_tile(rows, block_rows, min_steps=2):
    """Pick (padded_rows, tile): tile is a multiple of 8 dividing padded_rows.

    Keeps the tile as large as possible (up to block_rows) while ensuring at
    least `min_steps` grid steps when rows allow it, so v7x's two TensorCores
    both get grid work under dimension_semantics=("parallel",).
    """
    rows_p = _round_up(max(rows, 1), 8)
    t = min(block_rows, rows_p)
    if rows_p > 8:
        t = min(t, _round_up(-(-rows_p // min_steps), 8))
    rows_p = _round_up(rows_p, t)
    return rows_p, t


# ----------------------------------------------------------------------------
# Dense (Linear) kernel, row-tiled  (used for the atom embedding)
# ----------------------------------------------------------------------------
def _linear_kernel(x_ref, w_ref, b_ref, o_ref):
    y = jnp.dot(x_ref[...], w_ref[...],
                preferred_element_type=jnp.float32) + b_ref[...]
    o_ref[...] = y.astype(o_ref.dtype)


def linear(x, w, b, *, block_rows=1024):
    rows, fin = x.shape
    fout = w.shape[1]
    rows_p, t = _choose_tile(rows, block_rows)
    if rows_p != rows:
        x = jnp.pad(x, ((0, rows_p - rows), (0, 0)))
    out = pl.pallas_call(
        _linear_kernel,
        out_shape=jax.ShapeDtypeStruct((rows_p, fout), jnp.float32),
        grid_spec=pltpu.PrefetchScalarGridSpec(
            num_scalar_prefetch=0,
            grid=(rows_p // t,),
            in_specs=[pl.BlockSpec((t, fin), lambda i: (i, 0)),
                      pl.BlockSpec((fin, fout), lambda i: (0, 0)),
                      pl.BlockSpec((1, fout), lambda i: (0, 0))],
            out_specs=pl.BlockSpec((t, fout), lambda i: (i, 0))),
        compiler_params=pltpu.CompilerParams(
            dimension_semantics=("parallel",)),
    )(x, w, b)
    return out[:rows]


# ----------------------------------------------------------------------------
# CGCNN ConvLayer kernel, atom-tiled
# ----------------------------------------------------------------------------
def _conv_kernel(nbr_a_ref, nbr_b_ref, atom_ref, w_self_ref, w_na_ref,
                 w_nbd_ref, b_ref, bn2s_ref, bn2b_ref, o_ref):
    """CGCNN ConvLayer hot path for one atom tile.

    nbr_a:(T,M,A) bf16   nbr_b:(T,M,B) bf16   atom:(T,A) f32
    w_self:(A,2A) f32    w_na:(A,2A) bf16     w_nbd:(B,2A) bf16  (BN1 folded)
    b:(1,2A) f32         bn2s/bn2b:(1,A)      out:(T,A) f32
    """
    A = atom_ref.shape[1]
    x = atom_ref[...]                                            # (T, A) f32

    # Self term + BN1-folded bias, computed once per atom (not per neighbor),
    # at full 64-lane (2A) width, then broadcast over M a single time.
    zs = (jnp.dot(x, w_self_ref[...], preferred_element_type=jnp.float32)
          + b_ref[...])                                          # (T, 2A)

    # One fused (filter|core) contraction per operand; bf16 in, f32 accumulate.
    dn = (((2,), (0,)), ((), ()))
    z = jax.lax.dot_general(nbr_a_ref[...], w_na_ref[...],
                            dimension_numbers=dn,
                            preferred_element_type=jnp.float32)
    z = z + jax.lax.dot_general(nbr_b_ref[...], w_nbd_ref[...],
                                dimension_numbers=dn,
                                preferred_element_type=jnp.float32)
    z = z + zs[:, None, :]                                       # (T, M, 2A)

    # Gates: slicing the 64-wide result at lane A is an in-vreg sub-select.
    nbr_filter = jax.nn.sigmoid(z[..., :A])
    nbr_core = jax.nn.softplus(z[..., A:])
    nbr_sumed = jnp.sum(nbr_filter * nbr_core, axis=1)           # (T, A)
    nbr_sumed = nbr_sumed * bn2s_ref[...] + bn2b_ref[...]        # eval-mode BN2
    o_ref[...] = jax.nn.softplus(x + nbr_sumed).astype(o_ref.dtype)


def conv_layer(atom_fea_p, bond_bf16_p, nbr_idx_p, p, *, tile):
    """One ConvLayer on the (already padded) atom axis.  Returns padded rows."""
    n_pad, A = atom_fea_p.shape
    _, M, B = bond_bf16_p.shape

    # Neighbor gather in bf16 (cast BEFORE jnp.take -> half the gather bytes).
    # No concat with the bond tensor: both go in as separate kernel inputs.
    nbr_atom_bf16 = jnp.take(atom_fea_p.astype(jnp.bfloat16), nbr_idx_p, axis=0)

    out = pl.pallas_call(
        _conv_kernel,
        out_shape=jax.ShapeDtypeStruct((n_pad, A), jnp.float32),
        grid_spec=pltpu.PrefetchScalarGridSpec(
            num_scalar_prefetch=0,
            grid=(n_pad // tile,),
            in_specs=[
                pl.BlockSpec((tile, M, A), lambda i: (i, 0, 0)),  # gathered nbr fea
                pl.BlockSpec((tile, M, B), lambda i: (i, 0, 0)),  # bond fea
                pl.BlockSpec((tile, A), lambda i: (i, 0)),        # atom_in
                pl.BlockSpec((A, 2 * A), lambda i: (0, 0)),       # w_self (f32)
                pl.BlockSpec((A, 2 * A), lambda i: (0, 0)),       # w_nb_atom (bf16)
                pl.BlockSpec((B, 2 * A), lambda i: (0, 0)),       # w_nb_bond (bf16)
                pl.BlockSpec((1, 2 * A), lambda i: (0, 0)),       # bias (BN1 folded)
                pl.BlockSpec((1, A), lambda i: (0, 0)),           # bn2 scale
                pl.BlockSpec((1, A), lambda i: (0, 0)),           # bn2 shift
            ],
            out_specs=pl.BlockSpec((tile, A), lambda i: (i, 0))),
        compiler_params=pltpu.CompilerParams(
            dimension_semantics=("parallel",)),
    )(nbr_atom_bf16, bond_bf16_p, atom_fea_p,
      p['w_self'], p['w_nb_atom'], p['w_nb_bond'],
      p['b'], p['bn2_scale'], p['bn2_shift'])
    return out


# ----------------------------------------------------------------------------
# Post-pooling head: ONE fused kernel on the tiny (N0, A) crystal matrix.
#   softplus -> conv_to_fc -> softplus -> [fc -> softplus]* -> fc_out
# ----------------------------------------------------------------------------
def _head_kernel(*refs, n_fc):
    x_ref = refs[0]
    o_ref = refs[-1]
    x = jax.nn.softplus(x_ref[...])
    x = jax.nn.softplus(
        jnp.dot(x, refs[1][...], preferred_element_type=jnp.float32)
        + refs[2][...])
    for i in range(n_fc):
        w = refs[3 + 2 * i][...]
        b = refs[4 + 2 * i][...]
        x = jax.nn.softplus(
            jnp.dot(x, w, preferred_element_type=jnp.float32) + b)
    ow = refs[3 + 2 * n_fc][...]
    ob = refs[4 + 2 * n_fc][...]
    o_ref[...] = (jnp.dot(x, ow, preferred_element_type=jnp.float32) + ob
                  ).astype(o_ref.dtype)


def head(crys_fea, ctf_w, ctf_b, fcs, out_w, out_b):
    rows = crys_fea.shape[0]
    rows_p = _round_up(max(rows, 1), 8)
    if rows_p != rows:
        crys_fea = jnp.pad(crys_fea, ((0, rows_p - rows), (0, 0)))
    n_fc = len(fcs)
    args = [crys_fea, ctf_w, ctf_b]
    for w, b in fcs:
        args += [w, b]
    args += [out_w, out_b]
    in_specs = [pl.BlockSpec(a.shape, lambda i: (0, 0)) for a in args]
    out = pl.pallas_call(
        functools.partial(_head_kernel, n_fc=n_fc),
        out_shape=jax.ShapeDtypeStruct((rows_p, 1), jnp.float32),
        grid_spec=pltpu.PrefetchScalarGridSpec(
            num_scalar_prefetch=0,
            grid=(1,),
            in_specs=in_specs,
            out_specs=pl.BlockSpec((rows_p, 1), lambda i: (0, 0))),
    )(*args)
    return out[:rows]


# ----------------------------------------------------------------------------
# Parameter initialization (deterministic, synthetic; no checkpoint loading)
# ----------------------------------------------------------------------------
def _init_linear(key, fin, fout):
    k1, k2 = jax.random.split(key)
    bound = 1.0 / np.sqrt(fin)
    w = jax.random.uniform(k1, (fin, fout), jnp.float32, -bound, bound)
    b = jax.random.uniform(k2, (1, fout), jnp.float32, -bound, bound)
    return w, b


def _fold_bn(num_features, eps=1e-5):
    """Eval-mode BatchNorm1d with default init (mean=0, var=1, gamma=1, beta=0).
    Real checkpoints must fold their actual running stats here."""
    gamma = jnp.ones((num_features,), jnp.float32)
    beta = jnp.zeros((num_features,), jnp.float32)
    mean = jnp.zeros((num_features,), jnp.float32)
    var = jnp.ones((num_features,), jnp.float32)
    scale = gamma / jnp.sqrt(var + eps)
    shift = beta - mean * scale
    return scale, shift


def _pack_conv_params(w, b, A):
    """Fold eval-BN1 + bias into the weight; split rows into self / gathered
    neighbor-atom / bond operands.  Filter|core columns stay fused (2A wide)."""
    bn1_scale, bn1_shift = _fold_bn(2 * A)
    bn2_scale, bn2_shift = _fold_bn(A)
    w_fold = w * bn1_scale[None, :]                        # (2A+B, 2A)
    b_fold = b.reshape(-1) * bn1_scale + bn1_shift         # (2A,)
    return {
        'w_self': w_fold[:A],                              # (A, 2A)  f32
        'w_nb_atom': w_fold[A:2 * A].astype(jnp.bfloat16),  # (A, 2A) bf16
        'w_nb_bond': w_fold[2 * A:].astype(jnp.bfloat16),   # (B, 2A) bf16
        'b': b_fold.reshape(1, 2 * A),                     # (1, 2A) f32
        'bn2_scale': bn2_scale.reshape(1, A),
        'bn2_shift': bn2_shift.reshape(1, A),
    }


def init_params(key, orig_atom_fea_len, nbr_fea_len,
                atom_fea_len, n_conv, h_fea_len, n_h):
    keys = jax.random.split(key, 4 + n_conv + max(n_h - 1, 0))
    ki = iter(keys)
    params = {}
    params['emb_w'], params['emb_b'] = _init_linear(next(ki),
                                                    orig_atom_fea_len,
                                                    atom_fea_len)
    convs = []
    for _ in range(n_conv):
        w, b = _init_linear(next(ki), 2 * atom_fea_len + nbr_fea_len,
                            2 * atom_fea_len)
        convs.append(_pack_conv_params(w, b, atom_fea_len))
    params['convs'] = convs
    params['ctf_w'], params['ctf_b'] = _init_linear(next(ki),
                                                    atom_fea_len, h_fea_len)
    fcs = []
    for _ in range(n_h - 1):
        fcs.append(_init_linear(next(ki), h_fea_len, h_fea_len))
    params['fcs'] = fcs
    params['out_w'], params['out_b'] = _init_linear(next(ki), h_fea_len, 1)
    return params


# ----------------------------------------------------------------------------
# Pooling: segment mean over per-crystal atom index lists (plain-JAX glue).
# Assumes crystal_atom_idx partitions the batch atoms (standard CGCNN batching).
# ----------------------------------------------------------------------------
def pooling(atom_fea, crystal_atom_idx):
    n_atoms = atom_fea.shape[0]
    n0 = len(crystal_atom_idx)
    seg = np.full((n_atoms,), n0, dtype=np.int32)    # unassigned -> dropped
    counts = np.zeros((n0,), dtype=np.float32)
    for i, idx in enumerate(crystal_atom_idx):
        idx = np.asarray(idx)
        seg[idx] = i
        counts[i] = idx.shape[0]
    seg = jnp.asarray(seg)
    counts = jnp.asarray(counts)
    summed = jax.ops.segment_sum(atom_fea, seg, num_segments=n0)
    return summed / counts[:, None]


# ----------------------------------------------------------------------------
# Full forward (matches Single_CGCNN.forward; the *_A inputs are unused there)
# ----------------------------------------------------------------------------
def single_cgcnn_forward(params,
                         atom_fea_A, nbr_fea_A, nbr_fea_idx_A, crystal_atom_idx_A,
                         atom_fea_B, nbr_fea_B, nbr_fea_idx_B, crystal_atom_idx_B,
                         *, block_atoms=1024):
    # The reference forward drops the A-side inputs entirely.
    atom_fea, nbr_fea, nbr_fea_idx, crystal_atom_idx = (
        atom_fea_B, nbr_fea_B, nbr_fea_idx_B, crystal_atom_idx_B)

    N, M = nbr_fea_idx.shape

    # embedding (row-tiled Pallas linear)
    atom_fea = linear(atom_fea, params['emb_w'], params['emb_b'])      # (N, A)

    # Pad the atom axis ONCE; bond tensor & indices are constant across layers
    # (bond tensor cast to bf16 once, reused every layer).
    n_pad, tile = _choose_tile(N, block_atoms)
    if n_pad != N:
        atom_fea = jnp.pad(atom_fea, ((0, n_pad - N), (0, 0)))
        nbr_fea = jnp.pad(nbr_fea, ((0, n_pad - N), (0, 0), (0, 0)))
        nbr_fea_idx = jnp.pad(nbr_fea_idx, ((0, n_pad - N), (0, 0)))
    bond_bf16 = nbr_fea.astype(jnp.bfloat16)

    # graph conv layers
    for p in params['convs']:
        atom_fea = conv_layer(atom_fea, bond_bf16, nbr_fea_idx, p, tile=tile)
    atom_fea = atom_fea[:N]

    # pooling: per-crystal mean over atoms
    crys_fea = pooling(atom_fea, crystal_atom_idx)

    # post-pooling head: single fused kernel over the N0 crystal rows
    out = head(crys_fea, params['ctf_w'], params['ctf_b'],
               params['fcs'], params['out_w'], params['out_b'])        # (N0, 1)
    return out


# ----------------------------------------------------------------------------
if __name__ == "__main__":
    # Small, module-consistent shapes.
    N = 16                 # total atoms in batch
    M = 8                  # max neighbors
    ORIG_FEA = 8           # orig_atom_fea_len
    NBR_FEA = 16           # nbr_fea_len
    ATOM_FEA = 32          # model_cfg.atom_feature_size
    N_CONV = 2             # model_cfg.num_convlayers
    H_FEA = 64             # model_cfg.hidden_feature_size
    N_H = 2                # model_cfg.num_hiddenlayers
    N0 = 2                 # crystals in batch

    key = jax.random.PRNGKey(0)
    k_par, k_af, k_nf, k_idx = jax.random.split(key, 4)

    params = init_params(k_par, ORIG_FEA, NBR_FEA, ATOM_FEA, N_CONV, H_FEA, N_H)

    atom_fea_B = jax.random.normal(k_af, (N, ORIG_FEA), jnp.float32)
    nbr_fea_B = jax.random.normal(k_nf, (N, M, NBR_FEA), jnp.float32)
    nbr_fea_idx_B = jax.random.randint(k_idx, (N, M), 0, N, jnp.int32)
    crystal_atom_idx_B = [np.arange(0, 8, dtype=np.int32),
                          np.arange(8, 16, dtype=np.int32)]

    # A-side inputs are part of the torch signature but unused in forward.
    atom_fea_A, nbr_fea_A = atom_fea_B, nbr_fea_B
    nbr_fea_idx_A, crystal_atom_idx_A = nbr_fea_idx_B, crystal_atom_idx_B

    out = single_cgcnn_forward(params,
                               atom_fea_A, nbr_fea_A, nbr_fea_idx_A,
                               crystal_atom_idx_A,
                               atom_fea_B, nbr_fea_B, nbr_fea_idx_B,
                               crystal_atom_idx_B)
    out = jax.block_until_ready(out)
    assert out.shape == (N0, 1) and out.dtype == jnp.float32
    assert bool(jnp.all(jnp.isfinite(out)))
    print("KERNEL_OK")
</pallas_src>

<mosaic_0001>
module attributes {stable_mosaic.version = 11 : i64} {
  func.func @_linear_kernel(%arg0: i32, %arg1: memref<8x8xf32, #tpu.memory_space<vmem>>, %arg2: memref<8x32xf32, #tpu.memory_space<vmem>>, %arg3: memref<1x32xf32, #tpu.memory_space<vmem>>, %arg4: memref<8x32xf32, #tpu.memory_space<vmem>>) attributes {dimension_semantics = [#tpu.dimension_semantics<parallel>], iteration_bounds = array<i64: 2>, scalar_prefetch = 0 : i64, scratch_operands = 0 : i64, tpu.core_type = #tpu.core_type<tc>, window_params = [{transform_indices = @transform_0, window_bounds = array<i64: 8, 8>}, {pipeline_mode = #tpu.pipeline_mode<synchronous>, transform_indices = @transform_1, window_bounds = array<i64: 8, 32>}, {pipeline_mode = #tpu.pipeline_mode<synchronous>, transform_indices = @transform_2, window_bounds = array<i64: 1, 32>}, {transform_indices = @transform_3, window_bounds = array<i64: 8, 32>}]} {
    %c0 = arith.constant 0 : index
    %c0_0 = arith.constant 0 : index
    %0 = vector.load %arg1[%c0, %c0_0] : memref<8x8xf32, #tpu.memory_space<vmem>>, vector<8x8xf32>
    %c0_1 = arith.constant 0 : index
    %c0_2 = arith.constant 0 : index
    %1 = vector.load %arg2[%c0_1, %c0_2] : memref<8x32xf32, #tpu.memory_space<vmem>>, vector<8x32xf32>
    %cst = arith.constant dense<0.000000e+00> : vector<8x32xf32>
    %2 = tpu.matmul %0, %1, %cst {dimension_numbers = #tpu.dot_dimension_numbers<[1], [0], [0], [1], [0, 0, 1, 1], [], []>} : vector<8x8xf32>, vector<8x32xf32>, vector<8x32xf32> -> vector<8x32xf32>
    %c0_3 = arith.constant 0 : index
    %c0_4 = arith.constant 0 : index
    %3 = vector.load %arg3[%c0_3, %c0_4] : memref<1x32xf32, #tpu.memory_space<vmem>>, vector<1x32xf32>
    %4 = vector.broadcast %3 : vector<1x32xf32> to vector<8x32xf32>
    %5 = arith.addf %2, %4 : vector<8x32xf32>
    %c0_5 = arith.constant 0 : index
    %c0_6 = arith.constant 0 : index
    %6 = vector.load %arg4[%c0_5, %c0_6] : memref<8x32xf32, #tpu.memory_space<vmem>>, vector<8x32xf32>
    tpu.vector_store %arg4[%c0_5, %c0_6], %5 {strides = array<i32>} : memref<8x32xf32, #tpu.memory_space<vmem>>, vector<8x32xf32>,
    return
  }
  func.func @transform_0(%arg0: i32) -> (i32, i32) {
    %c0_i32 = arith.constant 0 : i32
    %c0_i32_0 = arith.constant 0 : i32
    return %arg0, %c0_i32 : i32, i32
  }
  func.func @transform_1(%arg0: i32) -> (i32, i32) {
    %c0_i32 = arith.constant 0 : i32
    %c0_i32_0 = arith.constant 0 : i32
    %c0_i32_1 = arith.constant 0 : i32
    return %c0_i32, %c0_i32_0 : i32, i32
  }
  func.func @transform_2(%arg0: i32) -> (i32, i32) {
    %c0_i32 = arith.constant 0 : i32
    %c0_i32_0 = arith.constant 0 : i32
    %c0_i32_1 = arith.constant 0 : i32
    return %c0_i32, %c0_i32_0 : i32, i32
  }
  func.func @transform_3(%arg0: i32) -> (i32, i32) {
    %c0_i32 = arith.constant 0 : i32
    %c0_i32_0 = arith.constant 0 : i32
    return %arg0, %c0_i32 : i32, i32
  }
}

</mosaic_0001>

<llo_original>
// kernel: tpu_custom_call.1
$region0: #{tpu_custom_call.1}
  #allocation0 [shape = 'u32[]', space=smem, size = 0x4, offset = 0x4, fixed_abs, tag = 'smem constant byte address 0x4 - core index']
  #allocation1 [shape = 'u32[144,128]{1,0:T(1,128)}', space=vmem, size = 0x12000, scoped, tag = 'internal scratch']
  %s0 = inlined_call_operand.vmem [shape: f32[16,8], index: 0, kind: input, shape index: {}]
  %s1 = inlined_call_operand.vmem [shape: f32[8,32], index: 1, kind: input, shape index: {}]
  %s2 = inlined_call_operand.vmem [shape: f32[1,32], index: 2, kind: input, shape index: {}]
  %s3 = inlined_call_operand.hbm [shape: f32[16,32], index: 3, kind: output, shape index: {}]
  %s4 = sld [smem:[#allocation0]]
  $region45: #{tpu_custom_call.1} parent=0
    _
  %s6 = ssub.s32 1, %s4
  %s7 = scalar_select 0, %s6, %s4
  $region1: #{tpu_custom_call.1} parent=0
    #allocation2 [shape = 'u8[8192]{0}', space=vmem, size = 0x2000, scoped, tag = 'output window, operand 0']
    #allocation3 [shape = 's32[2]{0}', space=sflag, size = 0x8, scoped, tag = 'scoped memory for tpu_custom_call.1']
    %8 = vsyncpa [#allocation3], 0
    %s9 = scalar_lea.sflag [#allocation3], 1
    %10 = vsyncpa %s9, 0
    loop: start=0, step=1, limit=4
    $region2: #{tpu_custom_call.1} parent=1 // loop_pre_header
      _
    $region3: #{tpu_custom_call.1} parent=1 // loop_header
      %s12 = sphi 0, %s16
      %p13 = scmp.ge.s32.totalorder %s12, 4
      %s22 = sphi 0, %s24
      %s25 = sphi 0, %s22
      %s26 = sphi 0, %s25
      %s42 = sphi 0, %s26
      %s46 = sphi 0, %s46
      %s48 = sphi 0, %s46
      %s49 = sphi 0, %s48
      %s63 = sphi 0, %s49
      %s67 = sphi 0, %s67
      %s69 = sphi 0, %s67
      %s70 = sphi 0, %s69
      %s84 = sphi 0, %s70
      %s90 = sphi 0, %s92
      %s93 = sphi 0, %s90
      %s94 = sphi 0, %s93
      %s110 = sphi 0, %s94
    $region4: #{tpu_custom_call.1} parent=1 // loop_header_branch
      %15 = sbr.rel (%p13) target = $region8
    $region5: #{tpu_custom_call.1} parent=1 // loop_body
      %s17 = ssub.s32 %s12, 1
      %s18 = ssub.s32 %s12, 2
      %s19 = sadd.s32 %s12, 1
      %s20 = ssub.s32 %s12, %s19
      %p21 = scmp.eq.s32.totalorder %s20, 0
      %s23 = sadd.s32 %s22, 1
      %s24 = scalar_select %p21, %s22, %s23
      %p27 = pneg %p21
      %p28 = scmp.eq.s32.totalorder %s12, 1
      %p29 = por %p27, %p28
      %p30 = scmp.ne.s32.totalorder %s22, %s25
      %p31 = scmp.eq.s32.totalorder %s12, 0
      %p32 = por %p30, %p31
      %p33 = scmp.ne.s32.totalorder %s22, %s25
      %p34 = scmp.eq.s32.totalorder %s17, 1
      %p35 = por %p33, %p34
      %p36 = scmp.ne.s32.totalorder %s25, %s26
      %p37 = scmp.eq.s32.totalorder %s17, 0
      %p38 = por %p36, %p37
      %p39 = scmp.ne.s32.totalorder %s25, %s26
      %p40 = scmp.eq.s32.totalorder %s18, 1
      %p41 = por %p39, %p40
      %p43 = scmp.ne.s32.totalorder %s26, %s42
      %p44 = scmp.eq.s32.totalorder %s18, 0
      %p45 = por %p43, %p44
      %s47 = sadd.s32 %s46, 1
      %p50 = scmp.eq.s32.totalorder %s12, 1
      %p51 = scmp.ne.s32.totalorder %s46, %s48
      %p52 = scmp.eq.s32.totalorder %s12, 0
      %p53 = por %p51, %p52
      %p54 = scmp.ne.s32.totalorder %s46, %s48
      %p55 = scmp.eq.s32.totalorder %s17, 1
      %p56 = por %p54, %p55
      %p57 = scmp.ne.s32.totalorder %s48, %s49
      %p58 = scmp.eq.s32.totalorder %s17, 0
      %p59 = por %p57, %p58
      %p60 = scmp.ne.s32.totalorder %s48, %s49
      %p61 = scmp.eq.s32.totalorder %s18, 1
      %p62 = por %p60, %p61
      %p64 = scmp.ne.s32.totalorder %s49, %s63
      %p65 = scmp.eq.s32.totalorder %s18, 0
      %p66 = por %p64, %p65
      %s68 = sadd.s32 %s67, 1
      %p71 = scmp.eq.s32.totalorder %s12, 1
      %p72 = scmp.ne.s32.totalorder %s67, %s69
      %p73 = scmp.eq.s32.totalorder %s12, 0
      %p74 = por %p72, %p73
      %p75 = scmp.ne.s32.totalorder %s67, %s69
      %p76 = scmp.eq.s32.totalorder %s17, 1
      %p77 = por %p75, %p76
      %p78 = scmp.ne.s32.totalorder %s69, %s70
      %p79 = scmp.eq.s32.totalorder %s17, 0
      %p80 = por %p78, %p79
      %p81 = scmp.ne.s32.totalorder %s69, %s70
      %p82 = scmp.eq.s32.totalorder %s18, 1
      %p83 = por %p81, %p82
      %p85 = scmp.ne.s32.totalorder %s70, %s84
      %p86 = scmp.eq.s32.totalorder %s18, 0
      %p87 = por %p85, %p86
      %s88 = ssub.s32 %s12, %s19
      %p89 = scmp.eq.s32.totalorder %s88, 0
      %s91 = sadd.s32 %s90, 1
      %s92 = scalar_select %p89, %s90, %s91
      %p95 = pneg %p89
      %p96 = scmp.eq.s32.totalorder %s12, 1
      %p97 = por %p95, %p96
      %p98 = scmp.ne.s32.totalorder %s90, %s93
      %p99 = scmp.eq.s32.totalorder %s12, 0
      %p100 = por %p98, %p99
      %p101 = scmp.ne.s32.totalorder %s90, %s93
      %p102 = scmp.eq.s32.totalorder %s17, 1
      %p103 = por %p101, %p102
      %p104 = scmp.ne.s32.totalorder %s93, %s94
      %p105 = scmp.eq.s32.totalorder %s17, 0
      %p106 = por %p104, %p105
      %p107 = scmp.ne.s32.totalorder %s93, %s94
      %p108 = scmp.eq.s32.totalorder %s18, 1
      %p109 = por %p107, %p108
      %p111 = scmp.ne.s32.totalorder %s94, %s110
      %p112 = scmp.eq.s32.totalorder %s18, 0
      %p113 = por %p111, %p112
      %p114 = scmp.le.s32.totalorder 1, %s12
      %p115 = scmp.lt.s32.totalorder %s12, 3
      %p116 = pnand %p114, %p115
      %p117 = pneg %p116
      // Predicated region
      $region9: #{tpu_custom_call.1} parent=5 // pred_check
        _
      $region10: #{tpu_custom_call.1} parent=5 // pred_check_branch
        %119 = sbr.rel (%p116) target = $region12
      $region11: #{tpu_custom_call.1} parent=5 // pred_region
        %s120 = ssub.s32 %s12, 1
        // Predicated region
        $region13: #{tpu_custom_call.1} parent=11 // pred_check
          %p121 = pneg %p59
        $region14: #{tpu_custom_call.1} parent=11 // pred_check_branch
          %123 = sbr.rel (%p121) target = $region16
        $region15: #{tpu_custom_call.1} parent=11 // pred_region
          _
        $region16: #{tpu_custom_call.1} parent=11 // pred_fallthru
          _
        // Predicated region
        $region17: #{tpu_custom_call.1} parent=11 // pred_check
          %p124 = pneg %p80
        $region18: #{tpu_custom_call.1} parent=11 // pred_check_branch
          %126 = sbr.rel (%p124) target = $region20
        $region19: #{tpu_custom_call.1} parent=11 // pred_region
          _
        $region20: #{tpu_custom_call.1} parent=11 // pred_fallthru
          _
      $region12: #{tpu_custom_call.1} parent=5 // pred_fallthru
        _
      %p127 = scmp.lt.s32.totalorder %s12, 2
      // Predicated region
      $region21: #{tpu_custom_call.1} parent=5 // pred_check
        %p128 = pneg %p127
      $region22: #{tpu_custom_call.1} parent=5 // pred_check_branch
        %130 = sbr.rel (%p128) target = $region24
      $region23: #{tpu_custom_call.1} parent=5 // pred_region
        // Predicated region
        $region25: #{tpu_custom_call.1} parent=23 // pred_check
          %p131 = pneg %p32
        $region26: #{tpu_custom_call.1} parent=23 // pred_check_branch
          %133 = sbr.rel (%p131) target = $region28
        $region27: #{tpu_custom_call.1} parent=23 // pred_region
          %p134 = scmp.lt.s32.totalorder %s12, 1
          %s135 = scalar_select %p134, %s12, 1
          %s136 = smul.addr %s135, 8
          %s137 = scalar_lea.vmem %s0, %s136
        $region28: #{tpu_custom_call.1} parent=23 // pred_fallthru
          _
      $region24: #{tpu_custom_call.1} parent=5 // pred_fallthru
        _
      %p138 = scmp.le.s32.totalorder 1, %s12
      %p139 = scmp.lt.s32.totalorder %s12, 3
      %p140 = pnand %p138, %p139
      %p141 = pneg %p140
      // Predicated region
      $region29: #{tpu_custom_call.1} parent=5 // pred_check
        _
      $region30: #{tpu_custom_call.1} parent=5 // pred_check_branch
        %143 = sbr.rel (%p140) target = $region32
      $region31: #{tpu_custom_call.1} parent=5 // pred_region
        %s144 = ssub.s32 %s12, 1
        %p145 = scmp.lt.s32.totalorder %s17, 1
        %s146 = scalar_select %p145, %s17, 1
        %s147 = smul.addr %s146, 8
        %s148 = scalar_lea.vmem %s0, %s147
        %p149 = pneg %p38
        %p150 = pneg %p35
        %p151 = pneg %p59
        %p152 = pneg %p56
        %p153 = pneg %p80
        %p154 = pneg %p77
        %p155 = pneg %p106
        %p156 = pneg %p103
        %s157 = sand.u32 %s93, 1
        %s158 = scalar_lea.sflag [#allocation3], %s157
        %s159 = sand.u32 %s93, 1
        %s160 = smul.addr %s159, 8
        %s161 = scalar_lea.vmem [#allocation2], %s160
        %p162 = scmp.lt.s32.totalorder %s17, 1
        %s163 = scalar_select %p162, %s17, 1
        %s164 = smul.addr %s163, 8
        %s165 = scalar_lea.vmem %s0, %s164
        %v166 = vld [vmem:[%s165] sm:$0xff]
        %v167 = vld [vmem:[%s1] sm:$0xff]
        %v168 = vld [vmem:[%s2] sm:$0x1]
        %v170 = vlaneseq
        %v171 = vshrl.u32 %v170, 7
        %v172 = vsub.s32 0, %v171
        %v173 = vrot.slane %v168, %v172
        %vm175 = vcmask 64512
        %v177 = vsel %vm175, %v166, 0
        %179 = vmatprep.subr.mxu0 0.0
        %180 = vmatpush1.msra.mxu0 0.0
        %181 = vmatprep.subr.mxu0 0.0
        %182 = vmatpush1.msra.mxu0 0.0
        %183 = vmatprep.subr.mxu0 0.0
        %184 = vmatpush1.msra.mxu0 0.0
        %185 = vmatprep.subr.mxu0 0.0
        %186 = vmatpush1.msra.mxu0 0.0
        %187 = vmatprep.subr.mxu0 0.0
        %188 = vmatpush1.msra.mxu0 0.0
        %189 = vmatprep.subr.mxu0 0.0
        %190 = vmatpush1.msra.mxu0 0.0
        %191 = vmatprep.subr.mxu0 0.0
        %192 = vmatpush1.msra.mxu0 0.0
        %193 = vmatprep.subr.mxu0 0.0
        %194 = vmatpush1.msra.mxu0 0.0
        %195 = vmatprep.subr.mxu0 0.0
        %196 = vmatpush1.msra.mxu0 0.0
        %197 = vmatprep.subr.mxu0 0.0
        %198 = vmatpush1.msra.mxu0 0.0
        %199 = vmatprep.subr.mxu0 0.0
        %200 = vmatpush1.msra.mxu0 0.0
        %201 = vmatprep.subr.mxu0 0.0
        %202 = vmatpush1.msra.mxu0 0.0
        %203 = vmatprep.subr.mxu0 0.0
        %204 = vmatpush1.msra.mxu0 0.0
        %205 = vmatprep.subr.mxu0 0.0
        %206 = vmatpush1.msra.mxu0 0.0
        %207 = vmatprep.subr.mxu0 0.0
        %208 = vmatpush1.msra.mxu0 0.0
        %209 = vmatprep.subr.mxu0 0.0
        %210 = vmatpush1.msra.mxu0 %v167
        %211 = vmatprep.subr.mxu0 0.0
        %212 = vmatpush2.msra.mxu0 0.0
        %213 = vmatprep.subr.mxu0 0.0
        %214 = vmatpush2.msra.mxu0 0.0
        %215 = vmatprep.subr.mxu0 0.0
        %216 = vmatpush2.msra.mxu0 0.0
        %217 = vmatprep.subr.mxu0 0.0
        %218 = vmatpush2.msra.mxu0 0.0
        %219 = vmatprep.subr.mxu0 0.0
        %220 = vmatpush2.msra.mxu0 0.0
        %221 = vmatprep.subr.mxu0 0.0
        %222 = vmatpush2.msra.mxu0 0.0
        %223 = vmatprep.subr.mxu0 0.0
        %224 = vmatpush2.msra.mxu0 0.0
        %225 = vmatprep.subr.mxu0 0.0
        %226 = vmatpush2.msra.mxu0 0.0
        %227 = vmatprep.subr.mxu0 0.0
        %228 = vmatpush2.msra.mxu0 0.0
        %229 = vmatprep.subr.mxu0 0.0
        %230 = vmatpush2.msra.mxu0 0.0
        %231 = vmatprep.subr.mxu0 0.0
        %232 = vmatpush2.msra.mxu0 0.0
        %233 = vmatprep.subr.mxu0 0.0
        %234 = vmatpush2.msra.mxu0 0.0
        %235 = vmatprep.subr.mxu0 0.0
        %236 = vmatpush2.msra.mxu0 0.0
        %237 = vmatprep.subr.mxu0 0.0
        %238 = vmatpush2.msra.mxu0 0.0
        %239 = vmatprep.subr.mxu0 0.0
        %240 = vmatpush2.msra.mxu0 0.0
        %241 = vmatprep.subr.mxu0 0.0
        %242 = vmatpush2.msra.mxu0 0.0
        %243 = vmatprep.mubr.f32.mxu0 0.0
        %244 = vmatmul.mubr.f32.gmra.mxu0 %v177
        %v245 = vpop.f32.mrf.mxu0
        %v246 = vadd.f32 %v173, %v245
        %v247 = vpop.f32.mrf.mxu0
        %248 = vdwg.mxu0
        %vm249 = vcmask 261120
        %250 = vst.msk [vmem:[%s161] sm:$0xff] %vm249, %v246
        %s251 = sand.u32 %s93, 1
        %s252 = scalar_lea.sflag [#allocation3], %s251
        %s253 = sand.u32 %s93, 1
        %s254 = smul.addr %s253, 8
        %s255 = scalar_lea.vmem [#allocation2], %s254
        // Predicated region
        $region33: #{tpu_custom_call.1} parent=31 // pred_check
          %p256 = pneg %p103
        $region34: #{tpu_custom_call.1} parent=31 // pred_check_branch
          %258 = sbr.rel (%p256) target = $region36
        $region35: #{tpu_custom_call.1} parent=31 // pred_region
          %s260 = ssub.s32 128, 128
          %261 = vsyncadd %s252, %s260
          %s262 = smul.addr %s17, 128
          %s263 = scalar_lea.hbm %s3, %s262
          %s265 = sshll.u32 %s255, 4
          %s266 = int_to_ptr.vmem [resolvable:$true] %s265
          %268 = dma.vmem_to_hbm [thread:$0]  %s266, 128, %s263, %s252
        $region36: #{tpu_custom_call.1} parent=31 // pred_fallthru
          _
      $region32: #{tpu_custom_call.1} parent=5 // pred_fallthru
        _
      %p269 = scmp.le.s32.totalorder 2, %s12
      // Predicated region
      $region37: #{tpu_custom_call.1} parent=5 // pred_check
        %p270 = pneg %p269
      $region38: #{tpu_custom_call.1} parent=5 // pred_check_branch
        %272 = sbr.rel (%p270) target = $region40
      $region39: #{tpu_custom_call.1} parent=5 // pred_region
        %s273 = ssub.s32 %s12, 2
        // Predicated region
        $region41: #{tpu_custom_call.1} parent=39 // pred_check
          %p274 = pneg %p109
        $region42: #{tpu_custom_call.1} parent=39 // pred_check_branch
          %276 = sbr.rel (%p274) target = $region44
        $region43: #{tpu_custom_call.1} parent=39 // pred_region
          %s277 = sand.u32 %s94, 1
          %s278 = scalar_lea.sflag [#allocation3], %s277
          %s279 = sand.u32 %s94, 1
          %s280 = smul.addr %s279, 8
          %s281 = scalar_lea.vmem [#allocation2], %s280
          %282 = dma.done %s278, 128
        $region44: #{tpu_custom_call.1} parent=39 // pred_fallthru
          _
      $region40: #{tpu_custom_call.1} parent=5 // pred_fallthru
        _
    $region6: #{tpu_custom_call.1} parent=1 // loop_footer
      %s16 = sadd.s32 1, %s12
    $region7: #{tpu_custom_call.1} parent=1 // loop_footer_branch
      %11 = sbr.rel target = $region3
    $region8: #{tpu_custom_call.1} parent=1 // loop_exit
      _
    %283 = vsyncpa [#allocation3], 1
    %s284 = scalar_lea.sflag [#allocation3], 1
    %285 = vsyncpa %s284, 1

</llo_original>
